<compile_context>
chip_gen: v7x
topology: tpu7x:2x2x1
jax: 0.10.0
libtpu: 0.0.40
codegen_flags: <defaults>
</compile_context>

<pallas_src>
import math

import jax
import jax.numpy as jnp
from jax.experimental import pallas as pl
from jax.experimental.pallas import tpu as pltpu


def make_divisible(x, divisor=8):
    return int(math.ceil(x / divisor) * divisor)


def sap_kernel(x_ref, w1_ref, b1_ref, w2_ref, b2_ref, o_ref):
    # x_ref : (C1, TP)    w1_ref: (CH, C1)   b1_ref: (CH, 1)
    # w2_ref: (C2, CH)    b2_ref: (C2, 1)    o_ref : (C2, TP)
    x = x_ref[...]

    # cv1: 1x1 conv == channel matmul on the MXU, f32 accumulation.
    h = jnp.dot(w1_ref[...], x, preferred_element_type=jnp.float32)
    h = h + b1_ref[...]                       # bias, lane-broadcast

    # Exact SiLU: kernel is HBM-bound, VPU/EUP slots have plenty of slack.
    h = h * jax.nn.sigmoid(h)

    # cv2: second 1x1 conv (cast intermediate to weight dtype if running bf16).
    y = jnp.dot(w2_ref[...], h.astype(w2_ref.dtype),
                preferred_element_type=jnp.float32)
    y = y + b2_ref[...]

    o_ref[...] = y.astype(o_ref.dtype)        # lane-dense, unmasked store


def _vmem_budget():
    """(activation-tile budget, vmem_limit_bytes), generation-aware."""
    try:
        info = pltpu.get_tpu_info()
        cap = int(getattr(info, "vmem_capacity_bytes", 64 << 20))
    except Exception:  # pragma: no cover - be conservative if query fails
        cap = 64 << 20
    if cap >= (100 << 20):          # v5e / v6e: 128 MiB physical VMEM
        return 20 << 20, 64 << 20
    return 8 << 20, 32 << 20        # v7x: 64 MiB VMEM -> stay conservative


def _choose_tp(P_pad, N, c1, c2, ch, itemsize, budget_bytes, min_programs=2):
    """Largest multiple-of-128 divisor of P_pad whose footprint fits the budget
    while keeping at least `min_programs` grid steps (two TensorCores on v7x)."""

    def fits(tp):
        act = 2 * (c1 + c2) * tp * itemsize   # double-buffered input + output tiles
        mid = ch * tp * 4                      # f32 intermediate (CH, tp)
        return act + mid <= budget_bytes

    divisors = [d for d in range(128, P_pad + 1, 128) if P_pad % d == 0]
    fitting = [d for d in divisors if fits(d)] or [128]
    for d in sorted(fitting, reverse=True):
        if N * (P_pad // d) >= min_programs:
            return d
    return min(fitting)                        # single-program case (tiny inputs)


def sap(x_nchw, w1, b1, w2, b2, compute_dtype=None):
    """x_nchw: (N, C1, H, W); w1: (CH, C1); b1: (CH,); w2: (C2, CH); b2: (C2,).
    Returns (N, C2, H, W).  compute_dtype=jnp.bfloat16 halves HBM traffic."""
    N, C1, H, W = x_nchw.shape
    CH = w1.shape[0]
    C2 = w2.shape[0]
    P = H * W
    P_pad = ((P + 127) // 128) * 128           # lane-align the spatial extent

    in_dtype = x_nchw.dtype
    act_dtype = jnp.dtype(compute_dtype) if compute_dtype is not None else jnp.dtype(in_dtype)
    itemsize = act_dtype.itemsize

    budget, vmem_limit = _vmem_budget()
    tp = _choose_tp(P_pad, N, C1, C2, CH, itemsize, budget)

    x = x_nchw.reshape(N, C1, P)               # free row-major reshape
    if P_pad != P:
        x = jnp.pad(x, ((0, 0), (0, 0), (0, P_pad - P)))
    x = x.astype(act_dtype)
    w1c = w1.astype(act_dtype)
    w2c = w2.astype(act_dtype)
    b1c = b1.reshape(CH, 1).astype(jnp.float32)
    b2c = b2.reshape(C2, 1).astype(jnp.float32)

    cost = pl.CostEstimate(
        flops=2 * (CH * C1 + C2 * CH) * N * P_pad,
        transcendentals=CH * N * P_pad,
        bytes_accessed=(C1 + C2) * N * P_pad * itemsize
        + (CH * C1 + C2 * CH) * itemsize + (CH + C2) * 4,
    )

    out = pl.pallas_call(
        sap_kernel,
        out_shape=jax.ShapeDtypeStruct((N, C2, P_pad), act_dtype),
        grid_spec=pltpu.PrefetchScalarGridSpec(
            num_scalar_prefetch=0,
            grid=(N, P_pad // tp),
            in_specs=[
                pl.BlockSpec((None, C1, tp), lambda n, p: (n, 0, p)),
                pl.BlockSpec((CH, C1), lambda n, p: (0, 0)),   # VMEM-resident weights
                pl.BlockSpec((CH, 1), lambda n, p: (0, 0)),
                pl.BlockSpec((C2, CH), lambda n, p: (0, 0)),
                pl.BlockSpec((C2, 1), lambda n, p: (0, 0)),
            ],
            out_specs=pl.BlockSpec((None, C2, tp), lambda n, p: (n, 0, p)),
        ),
        compiler_params=pltpu.CompilerParams(
            dimension_semantics=("parallel", "parallel"),
            vmem_limit_bytes=vmem_limit,
        ),
        cost_estimate=cost,
    )(x, w1c, b1c, w2c, b2c)

    out = out[:, :, :P].reshape(N, C2, H, W)   # strip lane padding, back to NCHW
    return out.astype(in_dtype)


def reference(x_nchw, w1, b1, w2, b2):
    h = jnp.einsum("nchw,dc->ndhw", x_nchw, w1,
                   precision=jax.lax.Precision.HIGHEST) + b1.reshape(1, -1, 1, 1)
    h = h * jax.nn.sigmoid(h)
    y = jnp.einsum("nchw,dc->ndhw", h, w2,
                   precision=jax.lax.Precision.HIGHEST) + b2.reshape(1, -1, 1, 1)
    return y


if __name__ == "__main__":
    # SAP(dim=32, r=8)  ->  ch = make_divisible(32 // 8, 8) = 8
    N, DIM, H, W, R = 2, 32, 16, 16, 8
    CH = make_divisible(DIM // R, 8)

    key = jax.random.PRNGKey(0)
    k1, k2, k3, k4, kx = jax.random.split(key, 5)

    # Conv2d(dim, ch, 1) weight (ch, dim, 1, 1) -> (ch, dim), bias (ch,)
    w1 = jax.random.normal(k1, (CH, DIM), jnp.float32) * 0.2
    b1 = 0.1 * jax.random.normal(k2, (CH,), jnp.float32)
    # Conv2d(ch, dim, 1) weight (dim, ch, 1, 1) -> (dim, ch), bias (dim,)
    w2 = jax.random.normal(k3, (DIM, CH), jnp.float32) * 0.2
    b2 = 0.1 * jax.random.normal(k4, (DIM,), jnp.float32)

    x = jax.random.normal(kx, (N, DIM, H, W), jnp.float32)

    y = jax.block_until_ready(sap(x, w1, b1, w2, b2))

    y_ref = reference(x, w1, b1, w2, b2)
    assert y.shape == (N, DIM, H, W), y.shape
    max_err = float(jnp.max(jnp.abs(y - y_ref)))
    assert jnp.allclose(y, y_ref, atol=1e-4, rtol=1e-4), max_err

    print("KERNEL_OK")
</pallas_src>

<mosaic_0001>
module attributes {stable_mosaic.version = 11 : i64} {
  func.func @sap_kernel(%arg0: i32, %arg1: i32, %arg2: memref<1x32x256xf32, #tpu.memory_space<vmem>>, %arg3: memref<8x32xf32, #tpu.memory_space<vmem>>, %arg4: memref<8x1xf32, #tpu.memory_space<vmem>>, %arg5: memref<32x8xf32, #tpu.memory_space<vmem>>, %arg6: memref<32x1xf32, #tpu.memory_space<vmem>>, %arg7: memref<1x32x256xf32, #tpu.memory_space<vmem>>) attributes {dimension_semantics = [#tpu.dimension_semantics<parallel>, #tpu.dimension_semantics<parallel>], iteration_bounds = array<i64: 2, 1>, scalar_prefetch = 0 : i64, scratch_operands = 0 : i64, tpu.core_type = #tpu.core_type<tc>, window_params = [{transform_indices = @transform_0, window_bounds = array<i64: 1, 32, 256>}, {pipeline_mode = #tpu.pipeline_mode<synchronous>, transform_indices = @transform_1, window_bounds = array<i64: 8, 32>}, {pipeline_mode = #tpu.pipeline_mode<synchronous>, transform_indices = @transform_2, window_bounds = array<i64: 8, 1>}, {pipeline_mode = #tpu.pipeline_mode<synchronous>, transform_indices = @transform_3, window_bounds = array<i64: 32, 8>}, {pipeline_mode = #tpu.pipeline_mode<synchronous>, transform_indices = @transform_4, window_bounds = array<i64: 32, 1>}, {transform_indices = @transform_5, window_bounds = array<i64: 1, 32, 256>}]} {
    %c0 = arith.constant 0 : index
    %c0_0 = arith.constant 0 : index
    %c0_1 = arith.constant 0 : index
    %0 = vector.load %arg2[%c0, %c0_0, %c0_1] : memref<1x32x256xf32, #tpu.memory_space<vmem>>, vector<1x32x256xf32>
    %1 = vector.shape_cast %0 : vector<1x32x256xf32> to vector<32x256xf32>
    %c0_2 = arith.constant 0 : index
    %c0_3 = arith.constant 0 : index
    %2 = vector.load %arg3[%c0_2, %c0_3] : memref<8x32xf32, #tpu.memory_space<vmem>>, vector<8x32xf32>
    %cst = arith.constant dense<0.000000e+00> : vector<8x256xf32>
    %3 = tpu.matmul %2, %1, %cst {dimension_numbers = #tpu.dot_dimension_numbers<[1], [0], [0], [1], [0, 0, 1, 1], [], []>} : vector<8x32xf32>, vector<32x256xf32>, vector<8x256xf32> -> vector<8x256xf32>
    %c0_4 = arith.constant 0 : index
    %c0_5 = arith.constant 0 : index
    %4 = vector.load %arg4[%c0_4, %c0_5] : memref<8x1xf32, #tpu.memory_space<vmem>>, vector<8x1xf32>
    %5 = vector.broadcast %4 : vector<8x1xf32> to vector<8x256xf32>
    %6 = arith.addf %3, %5 : vector<8x256xf32>
    %7 = arith.negf %6 : vector<8x256xf32>
    %8 = math.exp %7 : vector<8x256xf32>
    %cst_6 = arith.constant 1.000000e+00 : f32
    %9 = vector.broadcast %cst_6 : f32 to vector<8x256xf32>
    %10 = arith.addf %9, %8 : vector<8x256xf32>
    %11 = arith.divf %9, %10 : vector<8x256xf32>
    %12 = arith.mulf %6, %11 : vector<8x256xf32>
    %c0_7 = arith.constant 0 : index
    %c0_8 = arith.constant 0 : index
    %13 = vector.load %arg5[%c0_7, %c0_8] : memref<32x8xf32, #tpu.memory_space<vmem>>, vector<32x8xf32>
    %cst_9 = arith.constant dense<0.000000e+00> : vector<32x256xf32>
    %14 = tpu.matmul %13, %12, %cst_9 {dimension_numbers = #tpu.dot_dimension_numbers<[1], [0], [0], [1], [0, 0, 1, 1], [], []>} : vector<32x8xf32>, vector<8x256xf32>, vector<32x256xf32> -> vector<32x256xf32>
    %c0_10 = arith.constant 0 : index
    %c0_11 = arith.constant 0 : index
    %15 = vector.load %arg6[%c0_10, %c0_11] : memref<32x1xf32, #tpu.memory_space<vmem>>, vector<32x1xf32>
    %16 = vector.broadcast %15 : vector<32x1xf32> to vector<32x256xf32>
    %17 = arith.addf %14, %16 : vector<32x256xf32>
    %c0_12 = arith.constant 0 : index
    %c0_13 = arith.constant 0 : index
    %c0_14 = arith.constant 0 : index
    %18 = vector.load %arg7[%c0_12, %c0_13, %c0_14] : memref<1x32x256xf32, #tpu.memory_space<vmem>>, vector<1x32x256xf32>
    %19 = vector.shape_cast %18 : vector<1x32x256xf32> to vector<32x256xf32>
    %20 = vector.shape_cast %17 : vector<32x256xf32> to vector<1x32x256xf32>
    tpu.vector_store %arg7[%c0_12, %c0_13, %c0_14], %20 {strides = array<i32>} : memref<1x32x256xf32, #tpu.memory_space<vmem>>, vector<1x32x256xf32>,
    return
  }
  func.func @transform_0(%arg0: i32, %arg1: i32) -> (i32, i32, i32) {
    %c0_i32 = arith.constant 0 : i32
    %c0_i32_0 = arith.constant 0 : i32
    return %arg0, %c0_i32, %arg1 : i32, i32, i32
  }
  func.func @transform_1(%arg0: i32, %arg1: i32) -> (i32, i32) {
    %c0_i32 = arith.constant 0 : i32
    %c0_i32_0 = arith.constant 0 : i32
    %c0_i32_1 = arith.constant 0 : i32
    return %c0_i32, %c0_i32_0 : i32, i32
  }
  func.func @transform_2(%arg0: i32, %arg1: i32) -> (i32, i32) {
    %c0_i32 = arith.constant 0 : i32
    %c0_i32_0 = arith.constant 0 : i32
    %c0_i32_1 = arith.constant 0 : i32
    return %c0_i32, %c0_i32_0 : i32, i32
  }
  func.func @transform_3(%arg0: i32, %arg1: i32) -> (i32, i32) {
    %c0_i32 = arith.constant 0 : i32
    %c0_i32_0 = arith.constant 0 : i32
    %c0_i32_1 = arith.constant 0 : i32
    return %c0_i32, %c0_i32_0 : i32, i32
  }
  func.func @transform_4(%arg0: i32, %arg1: i32) -> (i32, i32) {
    %c0_i32 = arith.constant 0 : i32
    %c0_i32_0 = arith.constant 0 : i32
    %c0_i32_1 = arith.constant 0 : i32
    return %c0_i32, %c0_i32_0 : i32, i32
  }
  func.func @transform_5(%arg0: i32, %arg1: i32) -> (i32, i32, i32) {
    %c0_i32 = arith.constant 0 : i32
    %c0_i32_0 = arith.constant 0 : i32
    return %arg0, %c0_i32, %arg1 : i32, i32, i32
  }
}

</mosaic_0001>

<llo_original>
// kernel: tpu_custom_call.1
$region0: #{tpu_custom_call.1}
  #allocation0 [shape = 'u32[]', space=smem, size = 0x4, offset = 0x4, fixed_abs, tag = 'smem constant byte address 0x4 - core index']
  #allocation1 [shape = 'u32[144,128]{1,0:T(1,128)}', space=vmem, size = 0x12000, scoped, tag = 'internal scratch']
  %s0 = inlined_call_operand.hbm [shape: f32[2,32,256], index: 0, kind: input, shape index: {}]
  %s1 = inlined_call_operand.vmem [shape: f32[8,32], index: 1, kind: input, shape index: {}]
  %s2 = inlined_call_operand.vmem [shape: f32[8,1], index: 2, kind: input, shape index: {}]
  %s3 = inlined_call_operand.vmem [shape: f32[32,8], index: 3, kind: input, shape index: {}]
  %s4 = inlined_call_operand.vmem [shape: f32[32,1], index: 4, kind: input, shape index: {}]
  %s5 = inlined_call_operand.hbm [shape: f32[2,32,256], index: 5, kind: output, shape index: {}]
  %s6 = sld [smem:[#allocation0]]
  $region57: #{tpu_custom_call.1} parent=0
    _
  %s8 = ssub.s32 1, %s6
  %s9 = scalar_select 0, %s8, %s6
  $region1: #{tpu_custom_call.1} parent=0
    #allocation2 [shape = 'u8[65536]{0}', space=vmem, size = 0x10000, scoped, tag = 'input window, operand 0']
    #allocation3 [shape = 's32[2]{0}', space=sflag, size = 0x8, scoped, tag = 'scoped memory for tpu_custom_call.1']
    #allocation4 [shape = 's32[2]{0}', space=sflag, size = 0x8, scoped, tag = 'scoped memory for tpu_custom_call.1']
    #allocation5 [shape = 'u8[65536]{0}', space=vmem, size = 0x10000, scoped, tag = 'output window, operand 0']
    %10 = vsyncpa [#allocation3], 0
    %s11 = scalar_lea.sflag [#allocation3], 1
    %12 = vsyncpa %s11, 0
    %13 = vsyncpa [#allocation4], 0
    %s14 = scalar_lea.sflag [#allocation4], 1
    %15 = vsyncpa %s14, 0
    loop: start=0, step=1, limit=4
    $region2: #{tpu_custom_call.1} parent=1 // loop_pre_header
      _
    $region3: #{tpu_custom_call.1} parent=1 // loop_header
      %s17 = sphi 0, %s21
      %p18 = scmp.ge.s32.totalorder %s17, 4
      %s24 = sphi 0, %s36
      %s25 = sphi 0, %s32
      %s26 = sphi 0, %s24
      %s27 = sphi 0, %s25
      %s28 = sphi 0, %s26
      %s29 = sphi 0, %s27
      %s41 = sphi 0, %s43
      %s44 = sphi 0, %s41
      %s45 = sphi 0, %s44
      %s61 = sphi 0, %s45
      %s65 = sphi 0, %s65
      %s67 = sphi 0, %s65
      %s68 = sphi 0, %s67
      %s82 = sphi 0, %s68
      %s86 = sphi 0, %s86
      %s88 = sphi 0, %s86
      %s89 = sphi 0, %s88
      %s103 = sphi 0, %s89
      %s107 = sphi 0, %s107
      %s109 = sphi 0, %s107
      %s110 = sphi 0, %s109
      %s124 = sphi 0, %s110
      %s128 = sphi 0, %s128
      %s130 = sphi 0, %s128
      %s131 = sphi 0, %s130
      %s145 = sphi 0, %s131
      %s153 = sphi 0, %s155
      %s156 = sphi 0, %s153
      %s157 = sphi 0, %s156
      %s173 = sphi 0, %s157
    $region4: #{tpu_custom_call.1} parent=1 // loop_header_branch
      %20 = sbr.rel (%p18) target = $region8
    $region5: #{tpu_custom_call.1} parent=1 // loop_body
      %s22 = ssub.s32 %s17, 1
      %s23 = ssub.s32 %s17, 2
      %s30 = sadd.s32 1, %s25
      %p31 = scmp.ge.s32.totalorder %s30, 1
      %s32 = scalar_select %p31, 0, %s30
      %s33 = sadd.s32 1, %s24
      %s34 = scalar_select %p31, %s33, %s24
      %p35 = scmp.ge.s32.totalorder %s34, 2
      %s36 = scalar_select %p35, 0, %s34
      %s37 = ssub.s32 %s24, %s36
      %s38 = ssub.s32 %s25, %s32
      %s39 = sor.u32 %s37, %s38
      %p40 = scmp.eq.s32.totalorder %s39, 0
      %s42 = sadd.s32 %s41, 1
      %s43 = scalar_select %p40, %s41, %s42
      %p46 = pneg %p40
      %p47 = scmp.eq.s32.totalorder %s17, 1
      %p48 = por %p46, %p47
      %p49 = scmp.ne.s32.totalorder %s41, %s44
      %p50 = scmp.eq.s32.totalorder %s17, 0
      %p51 = por %p49, %p50
      %p52 = scmp.ne.s32.totalorder %s41, %s44
      %p53 = scmp.eq.s32.totalorder %s22, 1
      %p54 = por %p52, %p53
      %p55 = scmp.ne.s32.totalorder %s44, %s45
      %p56 = scmp.eq.s32.totalorder %s22, 0
      %p57 = por %p55, %p56
      %p58 = scmp.ne.s32.totalorder %s44, %s45
      %p59 = scmp.eq.s32.totalorder %s23, 1
      %p60 = por %p58, %p59
      %p62 = scmp.ne.s32.totalorder %s45, %s61
      %p63 = scmp.eq.s32.totalorder %s23, 0
      %p64 = por %p62, %p63
      %s66 = sadd.s32 %s65, 1
      %p69 = scmp.eq.s32.totalorder %s17, 1
      %p70 = scmp.ne.s32.totalorder %s65, %s67
      %p71 = scmp.eq.s32.totalorder %s17, 0
      %p72 = por %p70, %p71
      %p73 = scmp.ne.s32.totalorder %s65, %s67
      %p74 = scmp.eq.s32.totalorder %s22, 1
      %p75 = por %p73, %p74
      %p76 = scmp.ne.s32.totalorder %s67, %s68
      %p77 = scmp.eq.s32.totalorder %s22, 0
      %p78 = por %p76, %p77
      %p79 = scmp.ne.s32.totalorder %s67, %s68
      %p80 = scmp.eq.s32.totalorder %s23, 1
      %p81 = por %p79, %p80
      %p83 = scmp.ne.s32.totalorder %s68, %s82
      %p84 = scmp.eq.s32.totalorder %s23, 0
      %p85 = por %p83, %p84
      %s87 = sadd.s32 %s86, 1
      %p90 = scmp.eq.s32.totalorder %s17, 1
      %p91 = scmp.ne.s32.totalorder %s86, %s88
      %p92 = scmp.eq.s32.totalorder %s17, 0
      %p93 = por %p91, %p92
      %p94 = scmp.ne.s32.totalorder %s86, %s88
      %p95 = scmp.eq.s32.totalorder %s22, 1
      %p96 = por %p94, %p95
      %p97 = scmp.ne.s32.totalorder %s88, %s89
      %p98 = scmp.eq.s32.totalorder %s22, 0
      %p99 = por %p97, %p98
      %p100 = scmp.ne.s32.totalorder %s88, %s89
      %p101 = scmp.eq.s32.totalorder %s23, 1
      %p102 = por %p100, %p101
      %p104 = scmp.ne.s32.totalorder %s89, %s103
      %p105 = scmp.eq.s32.totalorder %s23, 0
      %p106 = por %p104, %p105
      %s108 = sadd.s32 %s107, 1
      %p111 = scmp.eq.s32.totalorder %s17, 1
      %p112 = scmp.ne.s32.totalorder %s107, %s109
      %p113 = scmp.eq.s32.totalorder %s17, 0
      %p114 = por %p112, %p113
      %p115 = scmp.ne.s32.totalorder %s107, %s109
      %p116 = scmp.eq.s32.totalorder %s22, 1
      %p117 = por %p115, %p116
      %p118 = scmp.ne.s32.totalorder %s109, %s110
      %p119 = scmp.eq.s32.totalorder %s22, 0
      %p120 = por %p118, %p119
      %p121 = scmp.ne.s32.totalorder %s109, %s110
      %p122 = scmp.eq.s32.totalorder %s23, 1
      %p123 = por %p121, %p122
      %p125 = scmp.ne.s32.totalorder %s110, %s124
      %p126 = scmp.eq.s32.totalorder %s23, 0
      %p127 = por %p125, %p126
      %s129 = sadd.s32 %s128, 1
      %p132 = scmp.eq.s32.totalorder %s17, 1
      %p133 = scmp.ne.s32.totalorder %s128, %s130
      %p134 = scmp.eq.s32.totalorder %s17, 0
      %p135 = por %p133, %p134
      %p136 = scmp.ne.s32.totalorder %s128, %s130
      %p137 = scmp.eq.s32.totalorder %s22, 1
      %p138 = por %p136, %p137
      %p139 = scmp.ne.s32.totalorder %s130, %s131
      %p140 = scmp.eq.s32.totalorder %s22, 0
      %p141 = por %p139, %p140
      %p142 = scmp.ne.s32.totalorder %s130, %s131
      %p143 = scmp.eq.s32.totalorder %s23, 1
      %p144 = por %p142, %p143
      %p146 = scmp.ne.s32.totalorder %s131, %s145
      %p147 = scmp.eq.s32.totalorder %s23, 0
      %p148 = por %p146, %p147
      %s149 = ssub.s32 %s24, %s36
      %s150 = ssub.s32 %s25, %s32
      %s151 = sor.u32 %s149, %s150
      %p152 = scmp.eq.s32.totalorder %s151, 0
      %s154 = sadd.s32 %s153, 1
      %s155 = scalar_select %p152, %s153, %s154
      %p158 = pneg %p152
      %p159 = scmp.eq.s32.totalorder %s17, 1
      %p160 = por %p158, %p159
      %p161 = scmp.ne.s32.totalorder %s153, %s156
      %p162 = scmp.eq.s32.totalorder %s17, 0
      %p163 = por %p161, %p162
      %p164 = scmp.ne.s32.totalorder %s153, %s156
      %p165 = scmp.eq.s32.totalorder %s22, 1
      %p166 = por %p164, %p165
      %p167 = scmp.ne.s32.totalorder %s156, %s157
      %p168 = scmp.eq.s32.totalorder %s22, 0
      %p169 = por %p167, %p168
      %p170 = scmp.ne.s32.totalorder %s156, %s157
      %p171 = scmp.eq.s32.totalorder %s23, 1
      %p172 = por %p170, %p171
      %p174 = scmp.ne.s32.totalorder %s157, %s173
      %p175 = scmp.eq.s32.totalorder %s23, 0
      %p176 = por %p174, %p175
      %p177 = scmp.le.s32.totalorder 1, %s17
      %p178 = scmp.lt.s32.totalorder %s17, 3
      %p179 = pnand %p177, %p178
      %p180 = pneg %p179
      // Predicated region
      $region9: #{tpu_custom_call.1} parent=5 // pred_check
        _
      $region10: #{tpu_custom_call.1} parent=5 // pred_check_branch
        %182 = sbr.rel (%p179) target = $region12
      $region11: #{tpu_custom_call.1} parent=5 // pred_region
        %s183 = ssub.s32 %s17, 1
        // Predicated region
        $region13: #{tpu_custom_call.1} parent=11 // pred_check
          %p184 = pneg %p78
        $region14: #{tpu_custom_call.1} parent=11 // pred_check_branch
          %186 = sbr.rel (%p184) target = $region16
        $region15: #{tpu_custom_call.1} parent=11 // pred_region
          _
        $region16: #{tpu_custom_call.1} parent=11 // pred_fallthru
          _
        // Predicated region
        $region17: #{tpu_custom_call.1} parent=11 // pred_check
          %p187 = pneg %p99
        $region18: #{tpu_custom_call.1} parent=11 // pred_check_branch
          %189 = sbr.rel (%p187) target = $region20
        $region19: #{tpu_custom_call.1} parent=11 // pred_region
          _
        $region20: #{tpu_custom_call.1} parent=11 // pred_fallthru
          _
        // Predicated region
        $region21: #{tpu_custom_call.1} parent=11 // pred_check
          %p190 = pneg %p120
        $region22: #{tpu_custom_call.1} parent=11 // pred_check_branch
          %192 = sbr.rel (%p190) target = $region24
        $region23: #{tpu_custom_call.1} parent=11 // pred_region
          _
        $region24: #{tpu_custom_call.1} parent=11 // pred_fallthru
          _
        // Predicated region
        $region25: #{tpu_custom_call.1} parent=11 // pred_check
          %p193 = pneg %p141
        $region26: #{tpu_custom_call.1} parent=11 // pred_check_branch
          %195 = sbr.rel (%p193) target = $region28
        $region27: #{tpu_custom_call.1} parent=11 // pred_region
          _
        $region28: #{tpu_custom_call.1} parent=11 // pred_fallthru
          _
      $region12: #{tpu_custom_call.1} parent=5 // pred_fallthru
        _
      %p196 = scmp.lt.s32.totalorder %s17, 2
      // Predicated region
      $region29: #{tpu_custom_call.1} parent=5 // pred_check
        %p197 = pneg %p196
      $region30: #{tpu_custom_call.1} parent=5 // pred_check_branch
        %199 = sbr.rel (%p197) target = $region32
      $region31: #{tpu_custom_call.1} parent=5 // pred_region
        // Predicated region
        $region33: #{tpu_custom_call.1} parent=31 // pred_check
          %p200 = pneg %p51
        $region34: #{tpu_custom_call.1} parent=31 // pred_check_branch
          %202 = sbr.rel (%p200) target = $region36
        $region35: #{tpu_custom_call.1} parent=31 // pred_region
          %s203 = sand.u32 %s41, 1
          %s204 = scalar_lea.sflag [#allocation3], %s203
          %s205 = sand.u32 %s41, 1
          %s206 = smul.addr %s205, 64
          %s207 = scalar_lea.vmem [#allocation2], %s206
          %s208 = smul.u32 2, %s25
          %s210 = ssub.s32 1024, 1024
          %211 = vsyncadd %s204, %s210
          %s212 = smul.addr %s24, 8
          %s213 = sadd.s32 %s208, %s212
          %s214 = smul.addr %s213, 128
          %s215 = scalar_lea.hbm %s0, %s214
          %s216 = sshll.u32 %s207, 4
          %s217 = int_to_ptr.vmem [resolvable:$true] %s216
          %222 = dma.hbm_to_vmem [thread:$0]  %s215, 1024, %s217, %s204, 256, 256, 16
        $region36: #{tpu_custom_call.1} parent=31 // pred_fallthru
          _
      $region32: #{tpu_custom_call.1} parent=5 // pred_fallthru
        _
      %p223 = scmp.le.s32.totalorder 1, %s17
      %p224 = scmp.lt.s32.totalorder %s17, 3
      %p225 = pnand %p223, %p224
      %p226 = pneg %p225
      // Predicated region
      $region37: #{tpu_custom_call.1} parent=5 // pred_check
        _
      $region38: #{tpu_custom_call.1} parent=5 // pred_check_branch
        %228 = sbr.rel (%p225) target = $region40
      $region39: #{tpu_custom_call.1} parent=5 // pred_region
        %s229 = ssub.s32 %s17, 1
        %s230 = sand.u32 %s44, 1
        %s231 = scalar_lea.sflag [#allocation3], %s230
        %s232 = sand.u32 %s44, 1
        %s233 = smul.addr %s232, 64
        %s234 = scalar_lea.vmem [#allocation2], %s233
        // Predicated region
        $region41: #{tpu_custom_call.1} parent=39 // pred_check
          %p235 = pneg %p57
        $region42: #{tpu_custom_call.1} parent=39 // pred_check_branch
          %237 = sbr.rel (%p235) target = $region44
        $region43: #{tpu_custom_call.1} parent=39 // pred_region
          %238 = dma.done %s231, 1024
        $region44: #{tpu_custom_call.1} parent=39 // pred_fallthru
          _
        %s239 = sand.u32 %s44, 1
        %s240 = scalar_lea.sflag [#allocation3], %s239
        %s241 = sand.u32 %s44, 1
        %s242 = smul.addr %s241, 64
        %s243 = scalar_lea.vmem [#allocation2], %s242
        %p244 = pneg %p57
        %p245 = pneg %p54
        %p246 = pneg %p78
        %p247 = pneg %p75
        %p248 = pneg %p99
        %p249 = pneg %p96
        %p250 = pneg %p120
        %p251 = pneg %p117
        %p252 = pneg %p141
        %p253 = pneg %p138
        %p254 = pneg %p169
        %p255 = pneg %p166
        %s256 = sand.u32 %s156, 1
        %s257 = scalar_lea.sflag [#allocation4], %s256
        %s258 = sand.u32 %s156, 1
        %s259 = smul.addr %s258, 64
        %s260 = scalar_lea.vmem [#allocation5], %s259
        %s261 = smul.u32 2, %s27
        %s262 = smul.u32 2, %s27
        %v263 = vld [vmem:[%s234] sm:$0xff]
        %v264 = vld [vmem:[%s234 + $0x8] sm:$0xff]
        %v265 = vld [vmem:[%s234 + $0x10] sm:$0xff]
        %v266 = vld [vmem:[%s234 + $0x18] sm:$0xff]
        %v267 = vld [vmem:[%s234 + $0x20] sm:$0xff]
        %v268 = vld [vmem:[%s234 + $0x28] sm:$0xff]
        %v269 = vld [vmem:[%s234 + $0x30] sm:$0xff]
        %v270 = vld [vmem:[%s234 + $0x38] sm:$0xff]
        %v271 = vld [vmem:[%s1] sm:$0xff]
        %v272 = vld [vmem:[%s2] sm:$0xff]
        %274 = vset.pattern.permute.xlu0 0
        %275 = vperm.xlu0 %274, %v272
        %v276 = vpop.permute.xlu0 %275
        %vm278 = vcmask 261120
        %v280 = vsel %vm278, %v271, 0
        %282 = vmatprep.subr.mxu0 %v264
        %283 = vmatpush1.msra.mxu0 %v263
        %284 = vmatprep.subr.mxu0 %v266
        %285 = vmatpush1.msra.mxu0 %v265
        %286 = vmatprep.subr.mxu0 %v268
        %287 = vmatpush1.msra.mxu0 %v267
        %288 = vmatprep.subr.mxu0 %v270
        %289 = vmatpush1.msra.mxu0 %v269
        %290 = vmatprep.subr.mxu0 0.0
        %291 = vmatpush1.msra.mxu0 0.0
        %292 = vmatprep.subr.mxu0 0.0
        %293 = vmatpush1.msra.mxu0 0.0
        %294 = vmatprep.subr.mxu0 0.0
        %295 = vmatpush1.msra.mxu0 0.0
        %296 = vmatprep.subr.mxu0 0.0
        %297 = vmatpush1.msra.mxu0 0.0
        %298 = vmatprep.subr.mxu0 0.0
        %299 = vmatpush1.msra.mxu0 0.0
        %300 = vmatprep.subr.mxu0 0.0
        %301 = vmatpush1.msra.mxu0 0.0
        %302 = vmatprep.subr.mxu0 0.0
        %303 = vmatpush1.msra.mxu0 0.0
        %304 = vmatprep.subr.mxu0 0.0
        %305 = vmatpush1.msra.mxu0 0.0
        %306 = vmatprep.subr.mxu0 0.0
        %307 = vmatpush1.msra.mxu0 0.0
        %308 = vmatprep.subr.mxu0 0.0
        %309 = vmatpush1.msra.mxu0 0.0
        %310 = vmatprep.subr.mxu0 0.0
        %311 = vmatpush1.msra.mxu0 0.0
        %312 = vmatprep.subr.mxu0 0.0
        %313 = vmatpush1.msra.mxu0 0.0
        %314 = vmatprep.subr.mxu0 0.0
        %315 = vmatpush1.msra.mxu0 0.0
        %316 = vmatprep.subr.mxu0 0.0
        %317 = vmatpush1.msra.mxu0 0.0
        %318 = vmatprep.subr.mxu0 0.0
        %319 = vmatpush1.msra.mxu0 0.0
        %320 = vmatprep.subr.mxu0 0.0
        %321 = vmatpush1.msra.mxu0 0.0
        %322 = vmatprep.subr.mxu0 0.0
        %323 = vmatpush1.msra.mxu0 0.0
        %324 = vmatprep.subr.mxu0 0.0
        %325 = vmatpush1.msra.mxu0 0.0
        %326 = vmatprep.subr.mxu0 0.0
        %327 = vmatpush1.msra.mxu0 0.0
        %328 = vmatprep.subr.mxu0 0.0
        %329 = vmatpush1.msra.mxu0 0.0
        %330 = vmatprep.subr.mxu0 0.0
        %331 = vmatpush1.msra.mxu0 0.0
        %332 = vmatprep.subr.mxu0 0.0
        %333 = vmatpush1.msra.mxu0 0.0
        %334 = vmatprep.subr.mxu0 0.0
        %335 = vmatpush1.msra.mxu0 0.0
        %336 = vmatprep.subr.mxu0 0.0
        %337 = vmatpush1.msra.mxu0 0.0
        %338 = vmatprep.subr.mxu0 0.0
        %339 = vmatpush1.msra.mxu0 0.0
        %340 = vmatprep.subr.mxu0 0.0
        %341 = vmatpush1.msra.mxu0 0.0
        %342 = vmatprep.subr.mxu0 0.0
        %343 = vmatpush1.msra.mxu0 0.0
        %344 = vmatprep.subr.mxu0 0.0
        %345 = vmatpush1.msra.mxu0 0.0
        %346 = vmatprep.mubr.f32.mxu0 0.0
        %347 = vmatmul.mubr.f32.gmra.mrb[0].mxu0 %v280
        %v348 = vpop.f32.mrb[0].mxu0
        %v349 = vadd.f32 %v276, %v348
        %v350 = vpop.f32.mrb[0].mxu0
        %v351 = vadd.f32 %v276, %v350
        %352 = vdwg.mxu0
        %v353 = vxor.u32 %v349, 2147483648
        %v354 = vxor.u32 %v351, 2147483648
        %v355 = vmul.f32 %v353, 1.442695
        %v356 = vpow.pop %v355
        %v357 = vmul.f32 %v354, 1.442695
        %v358 = vpow.pop %v357
        %v359 = vadd.f32 %v356, 1.0
        %v360 = vadd.f32 %v358, 1.0
        %v361 = vrcp.pop %v359
        %v362 = vmul.f32 1.0, %v361
        %v363 = vrcp.pop %v360
        %v364 = vmul.f32 1.0, %v363
        %v365 = vmul.f32 %v349, %v362
        %v366 = vmul.f32 %v351, %v364
        %v367 = vld [vmem:[%s3] sm:$0xff]
        %v368 = vld [vmem:[%s3 + $0x8] sm:$0xff]
        %v369 = vld [vmem:[%s3 + $0x10] sm:$0xff]
        %v370 = vld [vmem:[%s3 + $0x18] sm:$0xff]
        %v371 = vld [vmem:[%s4] sm:$0xff]
        %v372 = vld [vmem:[%s4 + $0x8] sm:$0xff]
        %v373 = vld [vmem:[%s4 + $0x10] sm:$0xff]
        %v374 = vld [vmem:[%s4 + $0x18] sm:$0xff]
        %376 = vset.pattern.permute.xlu0 0
        %377 = vperm.xlu0 %376, %v371
        %v378 = vpop.permute.xlu0 %377
        %381 = vset.pattern.permute.xlu0 0
        %382 = vperm.xlu0 %381, %v372
        %v383 = vpop.permute.xlu0 %382
        %386 = vset.pattern.permute.xlu0 0
        %387 = vperm.xlu0 %386, %v373
        %v388 = vpop.permute.xlu0 %387
        %391 = vset.pattern.permute.xlu0 0
        %392 = vperm.xlu0 %391, %v374
        %v393 = vpop.permute.xlu0 %392
        %vm395 = vcmask 64512
        %v397 = vsel %vm395, %v367, 0
        %v400 = vsel %vm395, %v368, 0
        %v403 = vsel %vm395, %v369, 0
        %v406 = vsel %vm395, %v370, 0
        %408 = vmatprep.subr.mxu0 %v366
        %409 = vmatpush1.msra.mxu0 %v365
        %410 = vmatprep.subr.mxu0 0.0
        %411 = vmatpush1.msra.mxu0 0.0
        %412 = vmatprep.subr.mxu0 0.0
        %413 = vmatpush1.msra.mxu0 0.0
        %414 = vmatprep.subr.mxu0 0.0
        %415 = vmatpush1.msra.mxu0 0.0
        %416 = vmatprep.subr.mxu0 0.0
        %417 = vmatpush1.msra.mxu0 0.0
        %418 = vmatprep.subr.mxu0 0.0
        %419 = vmatpush1.msra.mxu0 0.0
        %420 = vmatprep.subr.mxu0 0.0
        %421 = vmatpush1.msra.mxu0 0.0
        %422 = vmatprep.subr.mxu0 0.0
        %423 = vmatpush1.msra.mxu0 0.0
        %424 = vmatprep.subr.mxu0 0.0
        %425 = vmatpush1.msra.mxu0 0.0
        %426 = vmatprep.subr.mxu0 0.0
        %427 = vmatpush1.msra.mxu0 0.0
        %428 = vmatprep.subr.mxu0 0.0
        %429 = vmatpush1.msra.mxu0 0.0
        %430 = vmatprep.subr.mxu0 0.0
        %431 = vmatpush1.msra.mxu0 0.0
        %432 = vmatprep.subr.mxu0 0.0
        %433 = vmatpush1.msra.mxu0 0.0
        %434 = vmatprep.subr.mxu0 0.0
        %435 = vmatpush1.msra.mxu0 0.0
        %436 = vmatprep.subr.mxu0 0.0
        %437 = vmatpush1.msra.mxu0 0.0
        %438 = vmatprep.subr.mxu0 0.0
        %439 = vmatpush1.msra.mxu0 0.0
        %440 = vmatprep.subr.mxu0 0.0
        %441 = vmatpush1.msra.mxu0 0.0
        %442 = vmatprep.subr.mxu0 0.0
        %443 = vmatpush1.msra.mxu0 0.0
        %444 = vmatprep.subr.mxu0 0.0
        %445 = vmatpush1.msra.mxu0 0.0
        %446 = vmatprep.subr.mxu0 0.0
        %447 = vmatpush1.msra.mxu0 0.0
        %448 = vmatprep.subr.mxu0 0.0
        %449 = vmatpush1.msra.mxu0 0.0
        %450 = vmatprep.subr.mxu0 0.0
        %451 = vmatpush1.msra.mxu0 0.0
        %452 = vmatprep.subr.mxu0 0.0
        %453 = vmatpush1.msra.mxu0 0.0
        %454 = vmatprep.subr.mxu0 0.0
        %455 = vmatpush1.msra.mxu0 0.0
        %456 = vmatprep.subr.mxu0 0.0
        %457 = vmatpush1.msra.mxu0 0.0
        %458 = vmatprep.subr.mxu0 0.0
        %459 = vmatpush1.msra.mxu0 0.0
        %460 = vmatprep.subr.mxu0 0.0
        %461 = vmatpush1.msra.mxu0 0.0
        %462 = vmatprep.subr.mxu0 0.0
        %463 = vmatpush1.msra.mxu0 0.0
        %464 = vmatprep.subr.mxu0 0.0
        %465 = vmatpush1.msra.mxu0 0.0
        %466 = vmatprep.subr.mxu0 0.0
        %467 = vmatpush1.msra.mxu0 0.0
        %468 = vmatprep.subr.mxu0 0.0
        %469 = vmatpush1.msra.mxu0 0.0
        %470 = vmatprep.subr.mxu0 0.0
        %471 = vmatpush1.msra.mxu0 0.0
        %472 = vmatprep.mubr.f32.mxu0 0.0
        %473 = vmatmul.mubr.f32.gmra.mrb[0].mxu0 %v397
        %v474 = vpop.f32.mrb[0].mxu0
        %v475 = vadd.f32 %v378, %v474
        %v476 = vpop.f32.mrb[0].mxu0
        %v477 = vadd.f32 %v378, %v476
        %478 = vmatprep.mubr.f32.mxu0 0.0
        %479 = vmatmul.mubr.f32.gmra.mrb[0].mxu0 %v400
        %v480 = vpop.f32.mrb[0].mxu0
        %v481 = vadd.f32 %v383, %v480
        %v482 = vpop.f32.mrb[0].mxu0
        %v483 = vadd.f32 %v383, %v482
        %484 = vmatprep.mubr.f32.mxu0 0.0
        %485 = vmatmul.mubr.f32.gmra.mrb[0].mxu0 %v403
        %v486 = vpop.f32.mrb[0].mxu0
        %v487 = vadd.f32 %v388, %v486
        %v488 = vpop.f32.mrb[0].mxu0
        %v489 = vadd.f32 %v388, %v488
        %490 = vmatprep.mubr.f32.mxu0 0.0
        %491 = vmatmul.mubr.f32.gmra.mrb[0].mxu0 %v406
        %v492 = vpop.f32.mrb[0].mxu0
        %v493 = vadd.f32 %v393, %v492
        %v494 = vpop.f32.mrb[0].mxu0
        %v495 = vadd.f32 %v393, %v494
        %496 = vdwg.mxu0
        %497 = vst [vmem:[%s260] sm:$0xff] %v475
        %498 = vst [vmem:[%s260 + $0x8] sm:$0xff] %v477
        %499 = vst [vmem:[%s260 + $0x10] sm:$0xff] %v481
        %500 = vst [vmem:[%s260 + $0x18] sm:$0xff] %v483
        %501 = vst [vmem:[%s260 + $0x20] sm:$0xff] %v487
        %502 = vst [vmem:[%s260 + $0x28] sm:$0xff] %v489
        %503 = vst [vmem:[%s260 + $0x30] sm:$0xff] %v493
        %504 = vst [vmem:[%s260 + $0x38] sm:$0xff] %v495
        %s505 = sand.u32 %s156, 1
        %s506 = scalar_lea.sflag [#allocation4], %s505
        %s507 = sand.u32 %s156, 1
        %s508 = smul.addr %s507, 64
        %s509 = scalar_lea.vmem [#allocation5], %s508
        // Predicated region
        $region45: #{tpu_custom_call.1} parent=39 // pred_check
          %p510 = pneg %p166
        $region46: #{tpu_custom_call.1} parent=39 // pred_check_branch
          %512 = sbr.rel (%p510) target = $region48
        $region47: #{tpu_custom_call.1} parent=39 // pred_region
          %s513 = smul.u32 2, %s27
          %s515 = ssub.s32 1024, 1024
          %516 = vsyncadd %s506, %s515
          %s517 = smul.addr %s26, 8
          %s518 = sadd.s32 %s513, %s517
          %s519 = smul.addr %s518, 128
          %s520 = scalar_lea.hbm %s5, %s519
          %s521 = sshll.u32 %s509, 4
          %s522 = int_to_ptr.vmem [resolvable:$true] %s521
          %527 = dma.vmem_to_hbm [thread:$0]  %s522, 1024, %s520, %s506, 256, 256, 16
        $region48: #{tpu_custom_call.1} parent=39 // pred_fallthru
          _
      $region40: #{tpu_custom_call.1} parent=5 // pred_fallthru
        _
      %p528 = scmp.le.s32.totalorder 2, %s17
      // Predicated region
      $region49: #{tpu_custom_call.1} parent=5 // pred_check
        %p529 = pneg %p528
      $region50: #{tpu_custom_call.1} parent=5 // pred_check_branch
        %531 = sbr.rel (%p529) target = $region52
      $region51: #{tpu_custom_call.1} parent=5 // pred_region
        %s532 = ssub.s32 %s17, 2
        // Predicated region
        $region53: #{tpu_custom_call.1} parent=51 // pred_check
          %p533 = pneg %p172
        $region54: #{tpu_custom_call.1} parent=51 // pred_check_branch
          %535 = sbr.rel (%p533) target = $region56
        $region55: #{tpu_custom_call.1} parent=51 // pred_region
          %s536 = sand.u32 %s157, 1
          %s537 = scalar_lea.sflag [#allocation4], %s536
          %s538 = sand.u32 %s157, 1
          %s539 = smul.addr %s538, 64
          %s540 = scalar_lea.vmem [#allocation5], %s539
          %541 = dma.done %s537, 1024
        $region56: #{tpu_custom_call.1} parent=51 // pred_fallthru
          _
      $region52: #{tpu_custom_call.1} parent=5 // pred_fallthru
        _
    $region6: #{tpu_custom_call.1} parent=1 // loop_footer
      %s21 = sadd.s32 1, %s17
    $region7: #{tpu_custom_call.1} parent=1 // loop_footer_branch
      %16 = sbr.rel target = $region3
    $region8: #{tpu_custom_call.1} parent=1 // loop_exit
      _
    %542 = vsyncpa [#allocation3], 1
    %s543 = scalar_lea.sflag [#allocation3], 1
    %544 = vsyncpa %s543, 1
    %545 = vsyncpa [#allocation4], 1
    %s546 = scalar_lea.sflag [#allocation4], 1
    %547 = vsyncpa %s546, 1

</llo_original>
